<compile_context>
chip_gen: v5e
topology: v5e:2x2
jax: 0.10.0
libtpu: 0.0.40
codegen_flags: <defaults>
</compile_context>

<pallas_src>
import functools

import jax
import jax.numpy as jnp
from jax import lax
from jax.experimental import pallas as pl
from jax.experimental.pallas import tpu as pltpu

LARGE_NUM = 1.0e9  # stlcg's large positive init for the RNN state

_LANE = 128
_SUB = 8
_MAX_T_BLK = 512     # time rows per chunk (multiple of 8)
_MAX_L_BLK = 1024    # lanes per chunk (multiple of 128)


def _round_up(n, m):
    return -(-n // m) * m


def _temporal_kernel(x_ref, o_ref, h_ref, *, scale):
    """One (time_chunk, lane_chunk) tile.

    x_ref, o_ref: (T_BLK, L_BLK) input / output tiles (lane-dense, L_BLK % 128 == 0)
    h_ref:        (1, L_BLK) f32 VMEM scratch carrying the RNN state across
                  time chunks (grid axis 1, "arbitrary").
    """
    t_blk = x_ref.shape[0]
    n_groups = t_blk // _SUB

    # _initialize_rnn_cell: h0 = large positive constant, once per lane chunk.
    @pl.when(pl.program_id(1) == 0)
    def _init():
        h_ref[...] = jnp.full(h_ref.shape, LARGE_NUM, dtype=jnp.float32)

    scale_f = jnp.float32(scale)

    def group_body(g, h):
        base = pl.multiple_of(g * _SUB, _SUB)
        # Bulk, aligned (8, L) load; single upcast per group (keeps the serial
        # loop on the f32 VPU/EUP path even for bf16 inputs — v5e friendly).
        xg = x_ref[pl.ds(base, _SUB), :].astype(jnp.float32)
        for r in range(_SUB):                      # static unroll of 8 steps
            xt = xg[r:r + 1, :]                    # (1, L) lane-dense row
            if scale > 0:
                # Two-element softmin written as a numerically stable sigmoid:
                #   new_h = x + (h - x) * sigmoid(-(h - x) * scale)
                # Exactly equals softmax(-[h;x]*scale)·[h;x] but needs only ONE
                # exp on the carried critical path and never overflows.
                d = h - xt
                e = jnp.exp(-jnp.abs(d) * scale_f)            # EUP
                rcp = pl.reciprocal(1.0 + e, approx=True)     # EUP, not VPU div
                w = jnp.where(d >= 0, e * rcp, rcp)           # sigmoid(-d*scale)
                h = xt + w * d
            else:
                # Exact min recurrence (running minimum).
                h = jnp.minimum(h, xt)
            # Lane-dense store (L_BLK multiple of 128 -> unmasked lanes).
            o_ref[pl.ds(base + r, 1), :] = h.astype(o_ref.dtype)
        return h

    unroll = 2 if (n_groups >= 2 and n_groups % 2 == 0) else 1
    h_final = lax.fori_loop(0, n_groups, group_body, h_ref[...], unroll=unroll)
    h_ref[...] = h_final


def temporal_operator(x, scale=0.0):
    """Forward pass of Temporal_Operator (Always / interval=None) on TPU.

    x:     (B, T, D) float, [batch_size, time_dim, x_dim]
    scale: python float; <=0 -> exact min recurrence, >0 -> soft-min recurrence
    Returns (B, T, D) robustness trace, same dtype as x.
    """
    B, T, D = x.shape
    N = B * D

    # Lane packing: (B, T, D) -> (T, B*D), pad lanes to a multiple of 128.
    l_blk = min(_MAX_L_BLK, _round_up(N, _LANE))
    n_pad = _round_up(N, l_blk)
    t_blk = min(_MAX_T_BLK, _round_up(T, _SUB))
    t_pad = _round_up(T, t_blk)

    x2 = jnp.transpose(x, (1, 0, 2)).reshape(T, N)
    x2 = jnp.pad(x2, ((0, t_pad - T), (0, n_pad - N)))

    grid = (n_pad // l_blk, t_pad // t_blk)  # (lane chunks [parallel], time chunks [arbitrary])

    kernel = functools.partial(_temporal_kernel, scale=float(scale))
    out = pl.pallas_call(
        kernel,
        out_shape=jax.ShapeDtypeStruct((t_pad, n_pad), x.dtype),
        grid=grid,
        in_specs=[pl.BlockSpec((t_blk, l_blk), lambda j, t: (t, j))],
        out_specs=pl.BlockSpec((t_blk, l_blk), lambda j, t: (t, j)),
        scratch_shapes=[pltpu.VMEM((1, l_blk), jnp.float32)],
        compiler_params=pltpu.CompilerParams(
            dimension_semantics=("parallel", "arbitrary")),
    )(x2)

    y = out[:T, :N].reshape(T, B, D)
    return jnp.transpose(y, (1, 0, 2))


def _soft_reference(x, scale):
    """Pure-JAX reference of the PyTorch recurrence (softmax-based Minish)."""
    def step(h, xt):
        z = jnp.stack([h, xt], axis=0)                    # (2, B, D)
        w = jax.nn.softmax(-z * scale, axis=0)
        new = (w * z).sum(axis=0)
        return new, new
    h0 = jnp.full(x[:, 0, :].shape, LARGE_NUM, x.dtype)
    _, ys = lax.scan(step, h0, jnp.swapaxes(x, 0, 1))
    return jnp.swapaxes(ys, 0, 1)


if __name__ == "__main__":
    key = jax.random.PRNGKey(0)

    # Small canonical shape: [batch_size, time_dim, x_dim]
    B, T, D = 2, 8, 16
    x = jax.random.normal(key, (B, T, D), dtype=jnp.float32)

    # scale = 0 (default): exact min recurrence -> running cumulative min.
    out = jax.block_until_ready(temporal_operator(x, scale=0.0))
    assert out.shape == (B, T, D)
    ref = lax.cummin(x, axis=1)  # LARGE_NUM init never binds
    assert jnp.allclose(out, ref, atol=1e-6), "mismatch vs running-min reference"

    # soft-min (scale > 0) path vs pure-JAX softmax recurrence (loose tol: approx recip).
    out_soft = jax.block_until_ready(temporal_operator(x, scale=2.0))
    ref_soft = _soft_reference(x, 2.0)
    assert out_soft.shape == (B, T, D)
    assert jnp.all(jnp.isfinite(out_soft))
    assert jnp.allclose(out_soft, ref_soft, rtol=5e-2, atol=5e-2), "soft-min mismatch"

    # Multi time-chunk path (T > T_BLK) exercising the carried scratch.
    k2 = jax.random.PRNGKey(0)
    x_long = jax.random.normal(k2, (2, 600, 16), dtype=jnp.float32)
    out_long = jax.block_until_ready(temporal_operator(x_long, scale=0.0))
    assert jnp.allclose(out_long, lax.cummin(x_long, axis=1), atol=1e-6)

    # Multi lane-chunk path (B*D > L_BLK) exercising the parallel grid axis.
    k3 = jax.random.PRNGKey(0)
    x_wide = jax.random.normal(k3, (4, 40, 300), dtype=jnp.float32)
    out_wide = jax.block_until_ready(temporal_operator(x_wide, scale=0.0))
    assert jnp.allclose(out_wide, lax.cummin(x_wide, axis=1), atol=1e-6)

    print("KERNEL_OK")
</pallas_src>

<mosaic_0001>
module attributes {stable_mosaic.version = 11 : i64} {
  func.func @_temporal_kernel(%arg0: i32, %arg1: i32, %arg2: memref<8x128xf32, #tpu.memory_space<vmem>>, %arg3: memref<8x128xf32, #tpu.memory_space<vmem>>, %arg4: memref<1x128xf32, #tpu.memory_space<vmem>>) attributes {dimension_semantics = [#tpu.dimension_semantics<parallel>, #tpu.dimension_semantics<arbitrary>], iteration_bounds = array<i64: 1, 1>, scalar_prefetch = 0 : i64, scratch_operands = 1 : i64, tpu.core_type = #tpu.core_type<tc>, window_params = [{transform_indices = @transform_0, window_bounds = array<i64: 8, 128>}, {transform_indices = @transform_1, window_bounds = array<i64: 8, 128>}]} {
    %c0_i32 = arith.constant 0 : i32
    %0 = arith.cmpi eq, %arg1, %c0_i32 : i32
    %1 = arith.extui %0 : i1 to i32
    %c0_i32_0 = arith.constant 0 : i32
    %2 = arith.cmpi ne, %1, %c0_i32_0 : i32
    scf.if %2 {
      %cst = arith.constant 1.000000e+09 : f32
      %49 = vector.broadcast %cst : f32 to vector<1x128xf32>
      %c0_16 = arith.constant 0 : index
      %c0_17 = arith.constant 0 : index
      %50 = vector.load %arg4[%c0_16, %c0_17] : memref<1x128xf32, #tpu.memory_space<vmem>>, vector<1x128xf32>
      tpu.vector_store %arg4[%c0_16, %c0_17], %49 {strides = array<i32>} : memref<1x128xf32, #tpu.memory_space<vmem>>, vector<1x128xf32>,
    } else {
    }
    %c0 = arith.constant 0 : index
    %c0_1 = arith.constant 0 : index
    %3 = vector.load %arg4[%c0, %c0_1] : memref<1x128xf32, #tpu.memory_space<vmem>>, vector<1x128xf32>
    %c0_i32_2 = arith.constant 0 : i32
    %c8_i32 = arith.constant 8 : i32
    %4 = arith.muli %c0_i32_2, %c8_i32 : i32
    %5 = tpu.assume_multiple %4, 8 : i32
    %6 = arith.index_cast %5 : i32 to index
    %c0_3 = arith.constant 0 : index
    %7 = vector.load %arg2[%6, %c0_3] : memref<8x128xf32, #tpu.memory_space<vmem>>, vector<8x128xf32>
    %8 = vector.extract_strided_slice %7 {offsets = [0, 0], sizes = [1, 128], strides = [1, 1]} : vector<8x128xf32> to vector<1x128xf32>
    %9 = arith.minimumf %3, %8 : vector<1x128xf32>
    %c0_i32_4 = arith.constant 0 : i32
    %10 = arith.addi %5, %c0_i32_4 : i32
    %11 = arith.index_cast %10 : i32 to index
    %c0_5 = arith.constant 0 : index
    %12 = vector.load %arg3[%11, %c0_5] : memref<8x128xf32, #tpu.memory_space<vmem>>, vector<1x128xf32>
    tpu.vector_store %arg3[%11, %c0_5], %9 {strides = array<i32>} : memref<8x128xf32, #tpu.memory_space<vmem>>, vector<1x128xf32>,
    %13 = vector.extract_strided_slice %7 {offsets = [1, 0], sizes = [1, 128], strides = [1, 1]} : vector<8x128xf32> to vector<1x128xf32>
    %14 = arith.minimumf %9, %13 : vector<1x128xf32>
    %c1_i32 = arith.constant 1 : i32
    %15 = arith.addi %5, %c1_i32 : i32
    %16 = arith.index_cast %15 : i32 to index
    %c0_6 = arith.constant 0 : index
    %17 = vector.load %arg3[%16, %c0_6] : memref<8x128xf32, #tpu.memory_space<vmem>>, vector<1x128xf32>
    tpu.vector_store %arg3[%16, %c0_6], %14 {strides = array<i32>} : memref<8x128xf32, #tpu.memory_space<vmem>>, vector<1x128xf32>,
    %18 = vector.extract_strided_slice %7 {offsets = [2, 0], sizes = [1, 128], strides = [1, 1]} : vector<8x128xf32> to vector<1x128xf32>
    %19 = arith.minimumf %14, %18 : vector<1x128xf32>
    %c2_i32 = arith.constant 2 : i32
    %20 = arith.addi %5, %c2_i32 : i32
    %21 = arith.index_cast %20 : i32 to index
    %c0_7 = arith.constant 0 : index
    %22 = vector.load %arg3[%21, %c0_7] : memref<8x128xf32, #tpu.memory_space<vmem>>, vector<1x128xf32>
    tpu.vector_store %arg3[%21, %c0_7], %19 {strides = array<i32>} : memref<8x128xf32, #tpu.memory_space<vmem>>, vector<1x128xf32>,
    %23 = vector.extract_strided_slice %7 {offsets = [3, 0], sizes = [1, 128], strides = [1, 1]} : vector<8x128xf32> to vector<1x128xf32>
    %24 = arith.minimumf %19, %23 : vector<1x128xf32>
    %c3_i32 = arith.constant 3 : i32
    %25 = arith.addi %5, %c3_i32 : i32
    %26 = arith.index_cast %25 : i32 to index
    %c0_8 = arith.constant 0 : index
    %27 = vector.load %arg3[%26, %c0_8] : memref<8x128xf32, #tpu.memory_space<vmem>>, vector<1x128xf32>
    tpu.vector_store %arg3[%26, %c0_8], %24 {strides = array<i32>} : memref<8x128xf32, #tpu.memory_space<vmem>>, vector<1x128xf32>,
    %28 = vector.extract_strided_slice %7 {offsets = [4, 0], sizes = [1, 128], strides = [1, 1]} : vector<8x128xf32> to vector<1x128xf32>
    %29 = arith.minimumf %24, %28 : vector<1x128xf32>
    %c4_i32 = arith.constant 4 : i32
    %30 = arith.addi %5, %c4_i32 : i32
    %31 = arith.index_cast %30 : i32 to index
    %c0_9 = arith.constant 0 : index
    %32 = vector.load %arg3[%31, %c0_9] : memref<8x128xf32, #tpu.memory_space<vmem>>, vector<1x128xf32>
    tpu.vector_store %arg3[%31, %c0_9], %29 {strides = array<i32>} : memref<8x128xf32, #tpu.memory_space<vmem>>, vector<1x128xf32>,
    %33 = vector.extract_strided_slice %7 {offsets = [5, 0], sizes = [1, 128], strides = [1, 1]} : vector<8x128xf32> to vector<1x128xf32>
    %34 = arith.minimumf %29, %33 : vector<1x128xf32>
    %c5_i32 = arith.constant 5 : i32
    %35 = arith.addi %5, %c5_i32 : i32
    %36 = arith.index_cast %35 : i32 to index
    %c0_10 = arith.constant 0 : index
    %37 = vector.load %arg3[%36, %c0_10] : memref<8x128xf32, #tpu.memory_space<vmem>>, vector<1x128xf32>
    tpu.vector_store %arg3[%36, %c0_10], %34 {strides = array<i32>} : memref<8x128xf32, #tpu.memory_space<vmem>>, vector<1x128xf32>,
    %38 = vector.extract_strided_slice %7 {offsets = [6, 0], sizes = [1, 128], strides = [1, 1]} : vector<8x128xf32> to vector<1x128xf32>
    %39 = arith.minimumf %34, %38 : vector<1x128xf32>
    %c6_i32 = arith.constant 6 : i32
    %40 = arith.addi %5, %c6_i32 : i32
    %41 = arith.index_cast %40 : i32 to index
    %c0_11 = arith.constant 0 : index
    %42 = vector.load %arg3[%41, %c0_11] : memref<8x128xf32, #tpu.memory_space<vmem>>, vector<1x128xf32>
    tpu.vector_store %arg3[%41, %c0_11], %39 {strides = array<i32>} : memref<8x128xf32, #tpu.memory_space<vmem>>, vector<1x128xf32>,
    %43 = vector.extract_strided_slice %7 {offsets = [7, 0], sizes = [1, 128], strides = [1, 1]} : vector<8x128xf32> to vector<1x128xf32>
    %44 = arith.minimumf %39, %43 : vector<1x128xf32>
    %c7_i32 = arith.constant 7 : i32
    %45 = arith.addi %5, %c7_i32 : i32
    %46 = arith.index_cast %45 : i32 to index
    %c0_12 = arith.constant 0 : index
    %47 = vector.load %arg3[%46, %c0_12] : memref<8x128xf32, #tpu.memory_space<vmem>>, vector<1x128xf32>
    tpu.vector_store %arg3[%46, %c0_12], %44 {strides = array<i32>} : memref<8x128xf32, #tpu.memory_space<vmem>>, vector<1x128xf32>,
    %c1_i32_13 = arith.constant 1 : i32
    %c0_14 = arith.constant 0 : index
    %c0_15 = arith.constant 0 : index
    %48 = vector.load %arg4[%c0_14, %c0_15] : memref<1x128xf32, #tpu.memory_space<vmem>>, vector<1x128xf32>
    tpu.vector_store %arg4[%c0_14, %c0_15], %44 {strides = array<i32>} : memref<1x128xf32, #tpu.memory_space<vmem>>, vector<1x128xf32>,
    return
  }
  func.func @transform_0(%arg0: i32, %arg1: i32) -> (i32, i32) {
    %c0_i32 = arith.constant 0 : i32
    return %arg1, %arg0 : i32, i32
  }
  func.func @transform_1(%arg0: i32, %arg1: i32) -> (i32, i32) {
    %c0_i32 = arith.constant 0 : i32
    return %arg1, %arg0 : i32, i32
  }
}

</mosaic_0001>

<llo_original>
// kernel: tpu_custom_call.1
$region0: #{tpu_custom_call.1}
  #allocation0 [shape = 'u32[]', space=smem, size = 0x4, offset = 0x4, fixed_abs, tag = 'smem constant byte address 0x4 - core index']
  #allocation1 [shape = 'u32[72,128]{1,0:T(1,128)}', space=vmem, size = 0x9000, scoped, tag = 'internal scratch']
  #allocation2 [shape = 'f32[1,128]{1,0:T(1,128)}', space=vmem, size = 0x200, scoped, tag = 'scratch operand']
  %s0 = inlined_call_operand.hbm [shape: f32[8,128], index: 0, kind: input, shape index: {}]
  %s1 = inlined_call_operand.hbm [shape: f32[8,128], index: 1, kind: output, shape index: {}]
  %s2 = sld [smem:[#allocation0]]
  $region22: #{tpu_custom_call.1} parent=0
    _
  %s4 = ssub.s32 1, %s2
  %s5 = scalar_select 0, %s4, %s2
  $region1: #{tpu_custom_call.1} parent=0
    #allocation3 [shape = 'u8[4096]{0}', space=vmem, size = 0x1000, scoped, tag = 'input window, operand 0, single buffered']
    #allocation4 [shape = 's32[1]{0}', space=sflag, size = 0x4, scoped, tag = 'scoped memory for tpu_custom_call.1']
    #allocation5 [shape = 's32[1]{0}', space=sflag, size = 0x4, scoped, tag = 'scoped memory for tpu_custom_call.1']
    #allocation6 [shape = 'u8[4096]{0}', space=vmem, size = 0x1000, scoped, tag = 'output window, operand 0, single buffered']
    %6 = vsyncpa [#allocation4], 0
    %7 = vsyncpa [#allocation5], 0
    // Predicated region
    $region2: #{tpu_custom_call.1} parent=1 // pred_check
      _
    $region3: #{tpu_custom_call.1} parent=1 // pred_check_branch
      %9 = sbr.rel (0) target = $region5
    $region4: #{tpu_custom_call.1} parent=1 // pred_region
      %11 = vsyncadd [#allocation4], 0
      %s13 = sshll.u32 %s0, 4
      %s14 = int_to_ptr.hbm [resolvable:$true] %s13
      %s15 = sshll.u32 [#allocation3], 4
      %s16 = int_to_ptr.vmem [resolvable:$true] %s15
      %18 = dma.hbm_to_vmem [thread:$0]  %s14, 128, %s16, [#allocation4]
    $region5: #{tpu_custom_call.1} parent=1 // pred_fallthru
      _
    // Predicated region
    $region6: #{tpu_custom_call.1} parent=1 // pred_check
      _
    $region7: #{tpu_custom_call.1} parent=1 // pred_check_branch
      %20 = sbr.rel (0) target = $region9
    $region8: #{tpu_custom_call.1} parent=1 // pred_region
      %22 = dma.done [#allocation4], 128
    $region9: #{tpu_custom_call.1} parent=1 // pred_fallthru
      _
    %p23 = scmp.eq.s32.totalorder 0, 0
    // Predicated region
    $region10: #{tpu_custom_call.1} parent=1 // pred_check
      %p24 = pneg %p23
    $region11: #{tpu_custom_call.1} parent=1 // pred_check_branch
      %26 = sbr.rel (%p24) target = $region13
    $region12: #{tpu_custom_call.1} parent=1 // pred_region
      %27 = vst [vmem:[#allocation2] sm:$0x1] 1e+09
    $region13: #{tpu_custom_call.1} parent=1 // pred_fallthru
      _
    %v28 = vld [vmem:[#allocation2] sm:$0x1]
    %v29 = vld [vmem:[#allocation3] sm:$0xff]
    %v30 = vmin.f32 %v28, %v29
    %31 = vst [vmem:[#allocation6] sm:$0x1] %v30
    %33 = vst [vmem:[#allocation1] sm:$0xff] %v29
    %s34 = scalar_lea.vmem [#allocation1], 1
    %v35 = vld [vmem:[%s34] ss:$9 sm:$0xff]
    %v37 = vmin.f32 %v30, %v35
    %s38 = sadd.s32 0, 1
    %s39 = scalar_lea.vmem [#allocation6], %s38
    %40 = vst [vmem:[%s39] sm:$0x1] %v37
    %41 = vst [vmem:[#allocation1] sm:$0xff] %v29
    %s42 = scalar_lea.vmem [#allocation1], 2
    %v43 = vld [vmem:[%s42] ss:$9 sm:$0xff]
    %v45 = vmin.f32 %v37, %v43
    %s46 = sadd.s32 0, 2
    %s47 = scalar_lea.vmem [#allocation6], %s46
    %48 = vst [vmem:[%s47] sm:$0x1] %v45
    %49 = vst [vmem:[#allocation1] sm:$0xff] %v29
    %s50 = scalar_lea.vmem [#allocation1], 3
    %v51 = vld [vmem:[%s50] ss:$9 sm:$0xff]
    %v53 = vmin.f32 %v45, %v51
    %s54 = sadd.s32 0, 3
    %s55 = scalar_lea.vmem [#allocation6], %s54
    %56 = vst [vmem:[%s55] sm:$0x1] %v53
    %57 = vst [vmem:[#allocation1] sm:$0xff] %v29
    %s58 = scalar_lea.vmem [#allocation1], 4
    %v59 = vld [vmem:[%s58] ss:$9 sm:$0xff]
    %v61 = vmin.f32 %v53, %v59
    %s62 = sadd.s32 0, 4
    %s63 = scalar_lea.vmem [#allocation6], %s62
    %64 = vst [vmem:[%s63] sm:$0x1] %v61
    %65 = vst [vmem:[#allocation1] sm:$0xff] %v29
    %s66 = scalar_lea.vmem [#allocation1], 5
    %v67 = vld [vmem:[%s66] ss:$9 sm:$0xff]
    %v69 = vmin.f32 %v61, %v67
    %s70 = sadd.s32 0, 5
    %s71 = scalar_lea.vmem [#allocation6], %s70
    %72 = vst [vmem:[%s71] sm:$0x1] %v69
    %73 = vst [vmem:[#allocation1] sm:$0xff] %v29
    %s74 = scalar_lea.vmem [#allocation1], 6
    %v75 = vld [vmem:[%s74] ss:$9 sm:$0xff]
    %v77 = vmin.f32 %v69, %v75
    %s78 = sadd.s32 0, 6
    %s79 = scalar_lea.vmem [#allocation6], %s78
    %80 = vst [vmem:[%s79] sm:$0x1] %v77
    %81 = vst [vmem:[#allocation1] sm:$0xff] %v29
    %s82 = scalar_lea.vmem [#allocation1], 7
    %v83 = vld [vmem:[%s82] ss:$9 sm:$0xff]
    %v85 = vmin.f32 %v77, %v83
    %s86 = sadd.s32 0, 7
    %s87 = scalar_lea.vmem [#allocation6], %s86
    %88 = vst [vmem:[%s87] sm:$0x1] %v85
    %89 = vst [vmem:[#allocation2] sm:$0x1] %v85
    // Predicated region
    $region14: #{tpu_custom_call.1} parent=1 // pred_check
      _
    $region15: #{tpu_custom_call.1} parent=1 // pred_check_branch
      %91 = sbr.rel (0) target = $region17
    $region16: #{tpu_custom_call.1} parent=1 // pred_region
      %93 = vsyncadd [#allocation5], 0
      %s95 = sshll.u32 [#allocation6], 4
      %s96 = int_to_ptr.vmem [resolvable:$true] %s95
      %s97 = sshll.u32 %s1, 4
      %s98 = int_to_ptr.hbm [resolvable:$true] %s97
      %100 = dma.vmem_to_hbm [thread:$0]  %s96, 128, %s98, [#allocation5]
    $region17: #{tpu_custom_call.1} parent=1 // pred_fallthru
      _
    // Predicated region
    $region18: #{tpu_custom_call.1} parent=1 // pred_check
      _
    $region19: #{tpu_custom_call.1} parent=1 // pred_check_branch
      %102 = sbr.rel (0) target = $region21
    $region20: #{tpu_custom_call.1} parent=1 // pred_region
      %104 = dma.done [#allocation5], 128
    $region21: #{tpu_custom_call.1} parent=1 // pred_fallthru
      _
    %105 = vsyncpa [#allocation4], 1
    %106 = vsyncpa [#allocation5], 1

</llo_original>
